<compile_context>
chip_gen: v5e
topology: v5e:2x2
jax: 0.10.0
libtpu: 0.0.40
codegen_flags: <defaults>
</compile_context>

<pallas_src>
import jax
import jax.numpy as jnp
import numpy as np
from jax.experimental import pallas as pl
from jax.experimental.pallas import tpu as pltpu


def att_kernel(hist_ref, w1_ref, b1_ref, w2_ref, out_ref):
    # Block shapes (per grid step over a tile of Bt batch rows):
    #   hist_ref : (Bt, H, D)   w1_ref : (D, A)   b1_ref : (1, A)
    #   w2_ref   : (1, A)       out_ref: (Bt, D)
    bt, hh, dd = hist_ref.shape
    aa = w1_ref.shape[1]

    # affine1 + tanh: one MXU matmul over all Bt*H history rows of the tile.
    # (H is the full history axis, so the reshape is layout-preserving.)
    hidden = jnp.tanh(
        jnp.dot(hist_ref[...].reshape(bt * hh, dd), w1_ref[...],
                preferred_element_type=jnp.float32)
        + b1_ref[...])                                                  # (Bt*H, A)

    # affine2 (A -> 1): VPU multiply + lane reduction (not a 1-column MXU GEMV).
    logits = jnp.sum(hidden.reshape(bt, hh, aa) * w2_ref[...], axis=-1)  # (Bt, H)

    # softmax over the history axis (ATT calls Attention without a mask).
    m = jnp.max(logits, axis=-1, keepdims=True)
    e = jnp.exp(logits - m)
    alpha = e * pl.reciprocal(jnp.sum(e, axis=-1, keepdims=True), approx=False)

    # Weighted pooling of the history embeddings -> user representation.
    # Re-read the history tile from VMEM here instead of holding it live across
    # the matmul/tanh/softmax, keeping vreg pressure bounded for large tiles.
    out_ref[...] = jnp.sum(hist_ref[...] * alpha[:, :, None], axis=1)    # (Bt, D)


def prepare_attention_params(w1, b1, w2):
    """One-time weight prep (hoisted out of the per-call path).

    w1: (A, D) affine1.weight (PyTorch layout); b1: (A,); w2: (1, A) affine2.weight.
    Returns (w1_t (D, A), b1_row (1, A), w2_row (1, A)).
    """
    return jnp.transpose(w1), b1.reshape(1, -1), w2.reshape(1, -1)


def _pick_batch_tile(B, H, D, itemsize, target_tile_bytes):
    """Pick (bt, nb): largest batch tile reading ~target bytes of history/step.

    Guarantees either bt == B (single un-gridded step) or bt | B with
    bt % 8 == 0, so there is never a ragged last tile and never a pad copy.
    """
    per_row = H * D * itemsize
    want = max(1, target_tile_bytes // per_row)
    if want >= B:
        return B, 1                       # small batch: one step, no grid
    want = max(8, (int(want) // 8) * 8)   # sublane-align the (bt, D) out block
    for bt in range(min(want, B), 7, -8):
        if B % bt == 0:
            return bt, B // bt
    return B, 1                           # no aligned divisor: single step


def att_forward(candidate, history, w1_t, b1_row, w2_row, *,
                target_tile_bytes=2 << 20):
    """ATT forward: expand(Attention(history_embedding), news_num).

    candidate: (B, N, D) candidate_news_representation — only N is used, as in
               the reference forward.
    history:   (B, H, D) history_embedding (output of the abstract news_encoder).
    Returns (B, N, D) float32 user_representation.
    """
    B, N, D = candidate.shape
    _, H, _ = history.shape
    A = w1_t.shape[1]

    bt, nb = _pick_batch_tile(B, H, D, history.dtype.itemsize, target_tile_bytes)

    # VMEM budget: double-buffered history + output tiles, resident weights and
    # the (bt*H, A) hidden intermediate.  Clamp to 64 MiB (v7x physical VMEM);
    # floor of 32 MiB lifts v5e's 16 MiB scoped default for larger tiles.
    tile_bytes = bt * H * D * history.dtype.itemsize
    vmem_need = (2 * tile_bytes                      # history, double-buffered
                 + 2 * bt * D * 4                    # pooled output, double-buffered
                 + (D * A + 2 * A) * 4               # resident weights
                 + 2 * bt * H * A * 4)               # hidden intermediate slack
    vmem_limit = int(min(64 << 20, max(32 << 20, vmem_need + (4 << 20))))

    pooled = pl.pallas_call(
        att_kernel,
        out_shape=jax.ShapeDtypeStruct((B, D), jnp.float32),
        grid_spec=pltpu.PrefetchScalarGridSpec(
            num_scalar_prefetch=0,
            grid=(nb,),
            in_specs=[
                pl.BlockSpec((bt, H, D), lambda b: (b, 0, 0)),  # history tile
                pl.BlockSpec((D, A), lambda b: (0, 0)),         # W1^T (resident)
                pl.BlockSpec((1, A), lambda b: (0, 0)),         # b1
                pl.BlockSpec((1, A), lambda b: (0, 0)),         # w2 row
            ],
            out_specs=pl.BlockSpec((bt, D), lambda b: (b, 0)),
        ),
        compiler_params=pltpu.CompilerParams(
            dimension_semantics=("parallel",),        # batch tiles shard on v7x TCs
            vmem_limit_bytes=vmem_limit),
    )(history, w1_t, b1_row, w2_row)

    # .unsqueeze(1).expand(-1, news_num, -1) from the reference, done outside
    # the kernel so the kernel writeback stays N x smaller.
    return jnp.broadcast_to(pooled[:, None, :], (B, N, D))


def att_reference(candidate, history, w1, b1, w2):
    """Pure-JAX mirror of the PyTorch ATT forward."""
    B, N, D = candidate.shape
    hidden = jnp.tanh(jnp.einsum('bhd,ad->bha', history, w1) + b1)   # (B, H, A)
    a = jnp.einsum('bha,oa->bho', hidden, w2)[..., 0]                # (B, H)
    alpha = jax.nn.softmax(a, axis=1)
    user = jnp.einsum('bh,bhd->bd', alpha, history)                  # (B, D)
    return jnp.broadcast_to(user[:, None, :], (B, N, D))


if __name__ == "__main__":
    # batch, candidate news, max_history_num, news_embedding_dim, attention_dim
    B, N, H, D, A = 16, 3, 16, 32, 16

    key = jax.random.PRNGKey(0)
    k1, k2, k3, k4, k5 = jax.random.split(key, 5)

    candidate = jax.random.normal(k1, (B, N, D), dtype=jnp.float32)
    history = jax.random.normal(k2, (B, H, D), dtype=jnp.float32)

    # xavier-uniform-ish init (affine1 gain=tanh, affine2 plain), as in initialize()
    lim1 = float(np.sqrt(6.0 / (D + A))) * (5.0 / 3.0)
    w1 = jax.random.uniform(k3, (A, D), minval=-lim1, maxval=lim1, dtype=jnp.float32)
    b1 = 0.1 * jax.random.normal(k4, (A,), dtype=jnp.float32)
    lim2 = float(np.sqrt(6.0 / (A + 1)))
    w2 = jax.random.uniform(k5, (1, A), minval=-lim2, maxval=lim2, dtype=jnp.float32)

    # One-time weight prep (kept out of the hot forward path).
    w1_t, b1_row, w2_row = prepare_attention_params(w1, b1, w2)

    out = att_forward(candidate, history, w1_t, b1_row, w2_row)
    out = jax.block_until_ready(out)

    ref = att_reference(candidate, history, w1, b1, w2)
    np.testing.assert_allclose(np.asarray(out), np.asarray(ref), rtol=1e-5, atol=1e-5)

    print("KERNEL_OK")
</pallas_src>

<mosaic_0001>
module attributes {stable_mosaic.version = 11 : i64} {
  func.func @att_kernel(%arg0: i32, %arg1: memref<16x16x32xf32, #tpu.memory_space<vmem>>, %arg2: memref<32x16xf32, #tpu.memory_space<vmem>>, %arg3: memref<1x16xf32, #tpu.memory_space<vmem>>, %arg4: memref<1x16xf32, #tpu.memory_space<vmem>>, %arg5: memref<16x32xf32, #tpu.memory_space<vmem>>) attributes {dimension_semantics = [#tpu.dimension_semantics<parallel>], iteration_bounds = array<i64: 1>, scalar_prefetch = 0 : i64, scratch_operands = 0 : i64, tpu.core_type = #tpu.core_type<tc>, window_params = [{transform_indices = @transform_0, window_bounds = array<i64: 16, 16, 32>}, {pipeline_mode = #tpu.pipeline_mode<synchronous>, transform_indices = @transform_1, window_bounds = array<i64: 32, 16>}, {pipeline_mode = #tpu.pipeline_mode<synchronous>, transform_indices = @transform_2, window_bounds = array<i64: 1, 16>}, {pipeline_mode = #tpu.pipeline_mode<synchronous>, transform_indices = @transform_3, window_bounds = array<i64: 1, 16>}, {transform_indices = @transform_4, window_bounds = array<i64: 16, 32>}]} {
    %c0 = arith.constant 0 : index
    %c0_0 = arith.constant 0 : index
    %c0_1 = arith.constant 0 : index
    %0 = vector.load %arg1[%c0, %c0_0, %c0_1] : memref<16x16x32xf32, #tpu.memory_space<vmem>>, vector<16x16x32xf32>
    %1 = vector.shape_cast %0 : vector<16x16x32xf32> to vector<256x32xf32>
    %c0_2 = arith.constant 0 : index
    %c0_3 = arith.constant 0 : index
    %2 = vector.load %arg2[%c0_2, %c0_3] : memref<32x16xf32, #tpu.memory_space<vmem>>, vector<32x16xf32>
    %cst = arith.constant dense<0.000000e+00> : vector<256x16xf32>
    %3 = tpu.matmul %1, %2, %cst {dimension_numbers = #tpu.dot_dimension_numbers<[1], [0], [0], [1], [0, 0, 1, 1], [], []>} : vector<256x32xf32>, vector<32x16xf32>, vector<256x16xf32> -> vector<256x16xf32>
    %c0_4 = arith.constant 0 : index
    %c0_5 = arith.constant 0 : index
    %4 = vector.load %arg3[%c0_4, %c0_5] : memref<1x16xf32, #tpu.memory_space<vmem>>, vector<1x16xf32>
    %5 = vector.broadcast %4 : vector<1x16xf32> to vector<256x16xf32>
    %6 = arith.addf %3, %5 : vector<256x16xf32>
    %7 = math.tanh %6 : vector<256x16xf32>
    %8 = vector.shape_cast %7 : vector<256x16xf32> to vector<16x16x16xf32>
    %c0_6 = arith.constant 0 : index
    %c0_7 = arith.constant 0 : index
    %9 = vector.load %arg4[%c0_6, %c0_7] : memref<1x16xf32, #tpu.memory_space<vmem>>, vector<1x16xf32>
    %10 = vector.shape_cast %9 : vector<1x16xf32> to vector<1x1x16xf32>
    %11 = vector.broadcast %10 : vector<1x1x16xf32> to vector<16x16x16xf32>
    %12 = arith.mulf %8, %11 : vector<16x16x16xf32>
    %cst_8 = arith.constant dense<0.000000e+00> : vector<16x16xf32>
    %13 = vector.multi_reduction <add>, %12, %cst_8 [2] : vector<16x16x16xf32> to vector<16x16xf32>
    %cst_9 = arith.constant dense<0xFF800000> : vector<16xf32>
    %14 = vector.multi_reduction <maximumf>, %13, %cst_9 [1] : vector<16x16xf32> to vector<16xf32>
    %15 = vector.shape_cast %14 : vector<16xf32> to vector<16x1xf32>
    %16 = vector.broadcast %15 : vector<16x1xf32> to vector<16x16xf32>
    %17 = arith.subf %13, %16 : vector<16x16xf32>
    %18 = math.exp %17 : vector<16x16xf32>
    %cst_10 = arith.constant dense<0.000000e+00> : vector<16xf32>
    %19 = vector.multi_reduction <add>, %18, %cst_10 [1] : vector<16x16xf32> to vector<16xf32>
    %20 = vector.shape_cast %19 : vector<16xf32> to vector<16x1xf32>
    %21 = tpu.reciprocal %20 : vector<16x1xf32> -> vector<16x1xf32>
    %22 = vector.broadcast %21 : vector<16x1xf32> to vector<16x16xf32>
    %23 = arith.mulf %18, %22 : vector<16x16xf32>
    %c0_11 = arith.constant 0 : index
    %c0_12 = arith.constant 0 : index
    %c0_13 = arith.constant 0 : index
    %24 = vector.load %arg1[%c0_11, %c0_12, %c0_13] : memref<16x16x32xf32, #tpu.memory_space<vmem>>, vector<16x16x32xf32>
    %25 = vector.shape_cast %23 : vector<16x16xf32> to vector<16x16x1xf32>
    %26 = vector.broadcast %25 : vector<16x16x1xf32> to vector<16x16x32xf32>
    %27 = arith.mulf %24, %26 : vector<16x16x32xf32>
    %cst_14 = arith.constant dense<0.000000e+00> : vector<16x32xf32>
    %28 = vector.multi_reduction <add>, %27, %cst_14 [1] : vector<16x16x32xf32> to vector<16x32xf32>
    %c0_15 = arith.constant 0 : index
    %c0_16 = arith.constant 0 : index
    %29 = vector.load %arg5[%c0_15, %c0_16] : memref<16x32xf32, #tpu.memory_space<vmem>>, vector<16x32xf32>
    tpu.vector_store %arg5[%c0_15, %c0_16], %28 {strides = array<i32>} : memref<16x32xf32, #tpu.memory_space<vmem>>, vector<16x32xf32>,
    return
  }
  func.func @transform_0(%arg0: i32) -> (i32, i32, i32) {
    %c0_i32 = arith.constant 0 : i32
    %c0_i32_0 = arith.constant 0 : i32
    %c0_i32_1 = arith.constant 0 : i32
    return %arg0, %c0_i32, %c0_i32_0 : i32, i32, i32
  }
  func.func @transform_1(%arg0: i32) -> (i32, i32) {
    %c0_i32 = arith.constant 0 : i32
    %c0_i32_0 = arith.constant 0 : i32
    %c0_i32_1 = arith.constant 0 : i32
    return %c0_i32, %c0_i32_0 : i32, i32
  }
  func.func @transform_2(%arg0: i32) -> (i32, i32) {
    %c0_i32 = arith.constant 0 : i32
    %c0_i32_0 = arith.constant 0 : i32
    %c0_i32_1 = arith.constant 0 : i32
    return %c0_i32, %c0_i32_0 : i32, i32
  }
  func.func @transform_3(%arg0: i32) -> (i32, i32) {
    %c0_i32 = arith.constant 0 : i32
    %c0_i32_0 = arith.constant 0 : i32
    %c0_i32_1 = arith.constant 0 : i32
    return %c0_i32, %c0_i32_0 : i32, i32
  }
  func.func @transform_4(%arg0: i32) -> (i32, i32) {
    %c0_i32 = arith.constant 0 : i32
    %c0_i32_0 = arith.constant 0 : i32
    return %arg0, %c0_i32 : i32, i32
  }
}

</mosaic_0001>

<llo_original>
// kernel: tpu_custom_call.1
$region0: #{tpu_custom_call.1}
  #allocation0 [shape = 'u32[]', space=smem, size = 0x4, offset = 0x4, fixed_abs, tag = 'smem constant byte address 0x4 - core index']
  #allocation1 [shape = 'u32[72,128]{1,0:T(1,128)}', space=vmem, size = 0x9000, scoped, tag = 'internal scratch']
  %s0 = inlined_call_operand.hbm [shape: f32[16,16,32], index: 0, kind: input, shape index: {}]
  %s1 = inlined_call_operand.vmem [shape: f32[32,16], index: 1, kind: input, shape index: {}]
  %s2 = inlined_call_operand.vmem [shape: f32[1,16], index: 2, kind: input, shape index: {}]
  %s3 = inlined_call_operand.vmem [shape: f32[1,16], index: 3, kind: input, shape index: {}]
  %s4 = inlined_call_operand.hbm [shape: f32[16,32], index: 4, kind: output, shape index: {}]
  %s5 = sld [smem:[#allocation0]]
  $region30: #{tpu_custom_call.1} parent=0
    _
  %s7 = ssub.s32 1, %s5
  %s8 = scalar_select 0, %s7, %s5
  $region1: #{tpu_custom_call.1} parent=0
    #allocation2 [shape = 'u8[131072]{0}', space=vmem, size = 0x20000, scoped, tag = 'input window, operand 0, single buffered']
    #allocation3 [shape = 's32[1]{0}', space=sflag, size = 0x4, scoped, tag = 'scoped memory for tpu_custom_call.1']
    #allocation4 [shape = 's32[1]{0}', space=sflag, size = 0x4, scoped, tag = 'scoped memory for tpu_custom_call.1']
    #allocation5 [shape = 'u8[8192]{0}', space=vmem, size = 0x2000, scoped, tag = 'output window, operand 0, single buffered']
    %9 = vsyncpa [#allocation3], 0
    %10 = vsyncpa [#allocation4], 0
    // Predicated region
    $region2: #{tpu_custom_call.1} parent=1 // pred_check
      _
    $region3: #{tpu_custom_call.1} parent=1 // pred_check_branch
      %12 = sbr.rel (0) target = $region5
    $region4: #{tpu_custom_call.1} parent=1 // pred_region
      %14 = vsyncadd [#allocation3], 0
      %s15 = sshll.u32 %s0, 4
      %s16 = int_to_ptr.hbm [resolvable:$true] %s15
      %s17 = sshll.u32 [#allocation2], 4
      %s18 = int_to_ptr.vmem [resolvable:$true] %s17
      %23 = dma.hbm_to_vmem [thread:$0]  %s16, 4096, %s18, [#allocation3], 128, 128, 8
    $region5: #{tpu_custom_call.1} parent=1 // pred_fallthru
      _
    // Predicated region
    $region6: #{tpu_custom_call.1} parent=1 // pred_check
      _
    $region7: #{tpu_custom_call.1} parent=1 // pred_check_branch
      %25 = sbr.rel (0) target = $region9
    $region8: #{tpu_custom_call.1} parent=1 // pred_region
      _
    $region9: #{tpu_custom_call.1} parent=1 // pred_fallthru
      _
    // Predicated region
    $region10: #{tpu_custom_call.1} parent=1 // pred_check
      _
    $region11: #{tpu_custom_call.1} parent=1 // pred_check_branch
      %27 = sbr.rel (0) target = $region13
    $region12: #{tpu_custom_call.1} parent=1 // pred_region
      _
    $region13: #{tpu_custom_call.1} parent=1 // pred_fallthru
      _
    // Predicated region
    $region14: #{tpu_custom_call.1} parent=1 // pred_check
      _
    $region15: #{tpu_custom_call.1} parent=1 // pred_check_branch
      %29 = sbr.rel (0) target = $region17
    $region16: #{tpu_custom_call.1} parent=1 // pred_region
      _
    $region17: #{tpu_custom_call.1} parent=1 // pred_fallthru
      _
    // Predicated region
    $region18: #{tpu_custom_call.1} parent=1 // pred_check
      _
    $region19: #{tpu_custom_call.1} parent=1 // pred_check_branch
      %31 = sbr.rel (0) target = $region21
    $region20: #{tpu_custom_call.1} parent=1 // pred_region
      %33 = dma.done [#allocation3], 4096
    $region21: #{tpu_custom_call.1} parent=1 // pred_fallthru
      _
    %v34 = vld [vmem:[#allocation2] sm:$0xff]
    %v35 = vld [vmem:[#allocation2 + $0x8] sm:$0xff]
    %v36 = vld [vmem:[#allocation2 + $0x10] sm:$0xff]
    %v37 = vld [vmem:[#allocation2 + $0x18] sm:$0xff]
    %v38 = vld [vmem:[#allocation2 + $0x20] sm:$0xff]
    %v39 = vld [vmem:[#allocation2 + $0x28] sm:$0xff]
    %v40 = vld [vmem:[#allocation2 + $0x30] sm:$0xff]
    %v41 = vld [vmem:[#allocation2 + $0x38] sm:$0xff]
    %v42 = vld [vmem:[#allocation2 + $0x40] sm:$0xff]
    %v43 = vld [vmem:[#allocation2 + $0x48] sm:$0xff]
    %v44 = vld [vmem:[#allocation2 + $0x50] sm:$0xff]
    %v45 = vld [vmem:[#allocation2 + $0x58] sm:$0xff]
    %v46 = vld [vmem:[#allocation2 + $0x60] sm:$0xff]
    %v47 = vld [vmem:[#allocation2 + $0x68] sm:$0xff]
    %v48 = vld [vmem:[#allocation2 + $0x70] sm:$0xff]
    %v49 = vld [vmem:[#allocation2 + $0x78] sm:$0xff]
    %v50 = vld [vmem:[#allocation2 + $0x80] sm:$0xff]
    %v51 = vld [vmem:[#allocation2 + $0x88] sm:$0xff]
    %v52 = vld [vmem:[#allocation2 + $0x90] sm:$0xff]
    %v53 = vld [vmem:[#allocation2 + $0x98] sm:$0xff]
    %v54 = vld [vmem:[#allocation2 + $0xa0] sm:$0xff]
    %v55 = vld [vmem:[#allocation2 + $0xa8] sm:$0xff]
    %v56 = vld [vmem:[#allocation2 + $0xb0] sm:$0xff]
    %v57 = vld [vmem:[#allocation2 + $0xb8] sm:$0xff]
    %v58 = vld [vmem:[#allocation2 + $0xc0] sm:$0xff]
    %v59 = vld [vmem:[#allocation2 + $0xc8] sm:$0xff]
    %v60 = vld [vmem:[#allocation2 + $0xd0] sm:$0xff]
    %v61 = vld [vmem:[#allocation2 + $0xd8] sm:$0xff]
    %v62 = vld [vmem:[#allocation2 + $0xe0] sm:$0xff]
    %v63 = vld [vmem:[#allocation2 + $0xe8] sm:$0xff]
    %v64 = vld [vmem:[#allocation2 + $0xf0] sm:$0xff]
    %v65 = vld [vmem:[#allocation2 + $0xf8] sm:$0xff]
    %v66 = vld [vmem:[%s1] sm:$0xff]
    %v67 = vld [vmem:[%s1 + $0x8] sm:$0xff]
    %v68 = vld [vmem:[%s1 + $0x10] sm:$0xff]
    %v69 = vld [vmem:[%s1 + $0x18] sm:$0xff]
    %v70 = vld [vmem:[%s2] sm:$0x1]
    %v72 = vperm.slane %v70, 0
    %vm74 = vcmask 261120
    %v76 = vsel %vm74, %v34, 0
    %v79 = vsel %vm74, %v35, 0
    %v82 = vsel %vm74, %v36, 0
    %v85 = vsel %vm74, %v37, 0
    %v88 = vsel %vm74, %v38, 0
    %v91 = vsel %vm74, %v39, 0
    %v94 = vsel %vm74, %v40, 0
    %v97 = vsel %vm74, %v41, 0
    %v100 = vsel %vm74, %v42, 0
    %v103 = vsel %vm74, %v43, 0
    %v106 = vsel %vm74, %v44, 0
    %v109 = vsel %vm74, %v45, 0
    %v112 = vsel %vm74, %v46, 0
    %v115 = vsel %vm74, %v47, 0
    %v118 = vsel %vm74, %v48, 0
    %v121 = vsel %vm74, %v49, 0
    %v124 = vsel %vm74, %v50, 0
    %v127 = vsel %vm74, %v51, 0
    %v130 = vsel %vm74, %v52, 0
    %v133 = vsel %vm74, %v53, 0
    %v136 = vsel %vm74, %v54, 0
    %v139 = vsel %vm74, %v55, 0
    %v142 = vsel %vm74, %v56, 0
    %v145 = vsel %vm74, %v57, 0
    %v148 = vsel %vm74, %v58, 0
    %v151 = vsel %vm74, %v59, 0
    %v154 = vsel %vm74, %v60, 0
    %v157 = vsel %vm74, %v61, 0
    %v160 = vsel %vm74, %v62, 0
    %v163 = vsel %vm74, %v63, 0
    %v166 = vsel %vm74, %v64, 0
    %v169 = vsel %vm74, %v65, 0
    %171 = vmatpush.msra.mxu0 0.0
    %172 = vmatpush.msra.mxu0 0.0
    %173 = vmatpush.msra.mxu0 0.0
    %174 = vmatpush.msra.mxu0 0.0
    %175 = vmatpush.msra.mxu0 0.0
    %176 = vmatpush.msra.mxu0 0.0
    %177 = vmatpush.msra.mxu0 0.0
    %178 = vmatpush.msra.mxu0 0.0
    %179 = vmatpush.msra.mxu0 0.0
    %180 = vmatpush.msra.mxu0 0.0
    %181 = vmatpush.msra.mxu0 0.0
    %182 = vmatpush.msra.mxu0 0.0
    %183 = vmatpush.msra.mxu0 %v69
    %184 = vmatpush.msra.mxu0 %v68
    %185 = vmatpush.msra.mxu0 %v67
    %186 = vmatpush.msra.mxu0 %v66
    %187 = vmatmul.f32.gmra.mxu0 %v76
    %v188 = vpop.f32.mrf.mxu0
    %v189 = vadd.f32 %v72, %v188
    %190 = vmatmul.f32.gmra.mxu0 %v79
    %v191 = vpop.f32.mrf.mxu0
    %v192 = vadd.f32 %v72, %v191
    %193 = vmatmul.f32.gmra.mxu0 %v82
    %v194 = vpop.f32.mrf.mxu0
    %v195 = vadd.f32 %v72, %v194
    %196 = vmatmul.f32.gmra.mxu0 %v85
    %v197 = vpop.f32.mrf.mxu0
    %v198 = vadd.f32 %v72, %v197
    %199 = vmatmul.f32.gmra.mxu0 %v88
    %v200 = vpop.f32.mrf.mxu0
    %v201 = vadd.f32 %v72, %v200
    %202 = vmatmul.f32.gmra.mxu0 %v91
    %v203 = vpop.f32.mrf.mxu0
    %v204 = vadd.f32 %v72, %v203
    %205 = vmatmul.f32.gmra.mxu0 %v94
    %v206 = vpop.f32.mrf.mxu0
    %v207 = vadd.f32 %v72, %v206
    %208 = vmatmul.f32.gmra.mxu0 %v97
    %v209 = vpop.f32.mrf.mxu0
    %v210 = vadd.f32 %v72, %v209
    %211 = vmatmul.f32.gmra.mxu0 %v100
    %v212 = vpop.f32.mrf.mxu0
    %v213 = vadd.f32 %v72, %v212
    %214 = vmatmul.f32.gmra.mxu0 %v103
    %v215 = vpop.f32.mrf.mxu0
    %v216 = vadd.f32 %v72, %v215
    %217 = vmatmul.f32.gmra.mxu0 %v106
    %v218 = vpop.f32.mrf.mxu0
    %v219 = vadd.f32 %v72, %v218
    %220 = vmatmul.f32.gmra.mxu0 %v109
    %v221 = vpop.f32.mrf.mxu0
    %v222 = vadd.f32 %v72, %v221
    %223 = vmatmul.f32.gmra.mxu0 %v112
    %v224 = vpop.f32.mrf.mxu0
    %v225 = vadd.f32 %v72, %v224
    %226 = vmatmul.f32.gmra.mxu0 %v115
    %v227 = vpop.f32.mrf.mxu0
    %v228 = vadd.f32 %v72, %v227
    %229 = vmatmul.f32.gmra.mxu0 %v118
    %v230 = vpop.f32.mrf.mxu0
    %v231 = vadd.f32 %v72, %v230
    %232 = vmatmul.f32.gmra.mxu0 %v121
    %v233 = vpop.f32.mrf.mxu0
    %v234 = vadd.f32 %v72, %v233
    %235 = vmatmul.f32.gmra.mxu0 %v124
    %v236 = vpop.f32.mrf.mxu0
    %v237 = vadd.f32 %v72, %v236
    %238 = vmatmul.f32.gmra.mxu0 %v127
    %v239 = vpop.f32.mrf.mxu0
    %v240 = vadd.f32 %v72, %v239
    %241 = vmatmul.f32.gmra.mxu0 %v130
    %v242 = vpop.f32.mrf.mxu0
    %v243 = vadd.f32 %v72, %v242
    %244 = vmatmul.f32.gmra.mxu0 %v133
    %v245 = vpop.f32.mrf.mxu0
    %v246 = vadd.f32 %v72, %v245
    %247 = vmatmul.f32.gmra.mxu0 %v136
    %v248 = vpop.f32.mrf.mxu0
    %v249 = vadd.f32 %v72, %v248
    %250 = vmatmul.f32.gmra.mxu0 %v139
    %v251 = vpop.f32.mrf.mxu0
    %v252 = vadd.f32 %v72, %v251
    %253 = vmatmul.f32.gmra.mxu0 %v142
    %v254 = vpop.f32.mrf.mxu0
    %v255 = vadd.f32 %v72, %v254
    %256 = vmatmul.f32.gmra.mxu0 %v145
    %v257 = vpop.f32.mrf.mxu0
    %v258 = vadd.f32 %v72, %v257
    %259 = vmatmul.f32.gmra.mxu0 %v148
    %v260 = vpop.f32.mrf.mxu0
    %v261 = vadd.f32 %v72, %v260
    %262 = vmatmul.f32.gmra.mxu0 %v151
    %v263 = vpop.f32.mrf.mxu0
    %v264 = vadd.f32 %v72, %v263
    %265 = vmatmul.f32.gmra.mxu0 %v154
    %v266 = vpop.f32.mrf.mxu0
    %v267 = vadd.f32 %v72, %v266
    %268 = vmatmul.f32.gmra.mxu0 %v157
    %v269 = vpop.f32.mrf.mxu0
    %v270 = vadd.f32 %v72, %v269
    %271 = vmatmul.f32.gmra.mxu0 %v160
    %v272 = vpop.f32.mrf.mxu0
    %v273 = vadd.f32 %v72, %v272
    %274 = vmatmul.f32.gmra.mxu0 %v163
    %v275 = vpop.f32.mrf.mxu0
    %v276 = vadd.f32 %v72, %v275
    %277 = vmatmul.f32.gmra.mxu0 %v166
    %v278 = vpop.f32.mrf.mxu0
    %v279 = vadd.f32 %v72, %v278
    %280 = vmatmul.f32.gmra.mxu0 %v169
    %v281 = vpop.f32.mrf.mxu0
    %v282 = vadd.f32 %v72, %v281
    %283 = vdwg.mxu0
    %v284 = vtanh.pop %v189
    %v285 = vtanh.pop %v192
    %v286 = vtanh.pop %v195
    %v287 = vtanh.pop %v198
    %v288 = vtanh.pop %v201
    %v289 = vtanh.pop %v204
    %v290 = vtanh.pop %v207
    %v291 = vtanh.pop %v210
    %v292 = vtanh.pop %v213
    %v293 = vtanh.pop %v216
    %v294 = vtanh.pop %v219
    %v295 = vtanh.pop %v222
    %v296 = vtanh.pop %v225
    %v297 = vtanh.pop %v228
    %v298 = vtanh.pop %v231
    %v299 = vtanh.pop %v234
    %v300 = vtanh.pop %v237
    %v301 = vtanh.pop %v240
    %v302 = vtanh.pop %v243
    %v303 = vtanh.pop %v246
    %v304 = vtanh.pop %v249
    %v305 = vtanh.pop %v252
    %v306 = vtanh.pop %v255
    %v307 = vtanh.pop %v258
    %v308 = vtanh.pop %v261
    %v309 = vtanh.pop %v264
    %v310 = vtanh.pop %v267
    %v311 = vtanh.pop %v270
    %v312 = vtanh.pop %v273
    %v313 = vtanh.pop %v276
    %v314 = vtanh.pop %v279
    %v315 = vtanh.pop %v282
    %v316 = vld [vmem:[%s3] sm:$0x1]
    %v318 = vperm.slane %v316, 0
    %v320 = vmul.f32 %v284, %v318
    %v321 = vmul.f32 %v285, %v318
    %v322 = vmul.f32 %v286, %v318
    %v323 = vmul.f32 %v287, %v318
    %v324 = vmul.f32 %v288, %v318
    %v325 = vmul.f32 %v289, %v318
    %v326 = vmul.f32 %v290, %v318
    %v327 = vmul.f32 %v291, %v318
    %v328 = vmul.f32 %v292, %v318
    %v329 = vmul.f32 %v293, %v318
    %v330 = vmul.f32 %v294, %v318
    %v331 = vmul.f32 %v295, %v318
    %v332 = vmul.f32 %v296, %v318
    %v333 = vmul.f32 %v297, %v318
    %v334 = vmul.f32 %v298, %v318
    %v335 = vmul.f32 %v299, %v318
    %v336 = vmul.f32 %v300, %v318
    %v337 = vmul.f32 %v301, %v318
    %v338 = vmul.f32 %v302, %v318
    %v339 = vmul.f32 %v303, %v318
    %v340 = vmul.f32 %v304, %v318
    %v341 = vmul.f32 %v305, %v318
    %v342 = vmul.f32 %v306, %v318
    %v343 = vmul.f32 %v307, %v318
    %v344 = vmul.f32 %v308, %v318
    %v345 = vmul.f32 %v309, %v318
    %v346 = vmul.f32 %v310, %v318
    %v347 = vmul.f32 %v311, %v318
    %v348 = vmul.f32 %v312, %v318
    %v349 = vmul.f32 %v313, %v318
    %v350 = vmul.f32 %v314, %v318
    %v351 = vmul.f32 %v315, %v318
    %vm352 = vcmask 130048
    %v353 = vsel %vm352, %v320, 0.0
    %354 = vadd.xlane.f32.xlu0 %v353
    %v355 = vpop.xlane.xlu0 %354
    %v356 = vsel %vm352, %v321, 0.0
    %357 = vadd.xlane.f32.xlu0 %v356
    %v358 = vpop.xlane.xlu0 %357
    %v359 = vsel %vm352, %v322, 0.0
    %360 = vadd.xlane.f32.xlu0 %v359
    %v361 = vpop.xlane.xlu0 %360
    %v362 = vsel %vm352, %v323, 0.0
    %363 = vadd.xlane.f32.xlu0 %v362
    %v364 = vpop.xlane.xlu0 %363
    %v365 = vsel %vm352, %v324, 0.0
    %366 = vadd.xlane.f32.xlu0 %v365
    %v367 = vpop.xlane.xlu0 %366
    %v368 = vsel %vm352, %v325, 0.0
    %369 = vadd.xlane.f32.xlu0 %v368
    %v370 = vpop.xlane.xlu0 %369
    %v371 = vsel %vm352, %v326, 0.0
    %372 = vadd.xlane.f32.xlu0 %v371
    %v373 = vpop.xlane.xlu0 %372
    %v374 = vsel %vm352, %v327, 0.0
    %375 = vadd.xlane.f32.xlu0 %v374
    %v376 = vpop.xlane.xlu0 %375
    %v377 = vsel %vm352, %v328, 0.0
    %378 = vadd.xlane.f32.xlu0 %v377
    %v379 = vpop.xlane.xlu0 %378
    %v380 = vsel %vm352, %v329, 0.0
    %381 = vadd.xlane.f32.xlu0 %v380
    %v382 = vpop.xlane.xlu0 %381
    %v383 = vsel %vm352, %v330, 0.0
    %384 = vadd.xlane.f32.xlu0 %v383
    %v385 = vpop.xlane.xlu0 %384
    %v386 = vsel %vm352, %v331, 0.0
    %387 = vadd.xlane.f32.xlu0 %v386
    %v388 = vpop.xlane.xlu0 %387
    %v389 = vsel %vm352, %v332, 0.0
    %390 = vadd.xlane.f32.xlu0 %v389
    %v391 = vpop.xlane.xlu0 %390
    %v392 = vsel %vm352, %v333, 0.0
    %393 = vadd.xlane.f32.xlu0 %v392
    %v394 = vpop.xlane.xlu0 %393
    %v395 = vsel %vm352, %v334, 0.0
    %396 = vadd.xlane.f32.xlu0 %v395
    %v397 = vpop.xlane.xlu0 %396
    %v398 = vsel %vm352, %v335, 0.0
    %399 = vadd.xlane.f32.xlu0 %v398
    %v400 = vpop.xlane.xlu0 %399
    %v401 = vsel %vm352, %v336, 0.0
    %402 = vadd.xlane.f32.xlu0 %v401
    %v403 = vpop.xlane.xlu0 %402
    %v404 = vsel %vm352, %v337, 0.0
    %405 = vadd.xlane.f32.xlu0 %v404
    %v406 = vpop.xlane.xlu0 %405
    %v407 = vsel %vm352, %v338, 0.0
    %408 = vadd.xlane.f32.xlu0 %v407
    %v409 = vpop.xlane.xlu0 %408
    %v410 = vsel %vm352, %v339, 0.0
    %411 = vadd.xlane.f32.xlu0 %v410
    %v412 = vpop.xlane.xlu0 %411
    %v413 = vsel %vm352, %v340, 0.0
    %414 = vadd.xlane.f32.xlu0 %v413
    %v415 = vpop.xlane.xlu0 %414
    %v416 = vsel %vm352, %v341, 0.0
    %417 = vadd.xlane.f32.xlu0 %v416
    %v418 = vpop.xlane.xlu0 %417
    %v419 = vsel %vm352, %v342, 0.0
    %420 = vadd.xlane.f32.xlu0 %v419
    %v421 = vpop.xlane.xlu0 %420
    %v422 = vsel %vm352, %v343, 0.0
    %423 = vadd.xlane.f32.xlu0 %v422
    %v424 = vpop.xlane.xlu0 %423
    %v425 = vsel %vm352, %v344, 0.0
    %426 = vadd.xlane.f32.xlu0 %v425
    %v427 = vpop.xlane.xlu0 %426
    %v428 = vsel %vm352, %v345, 0.0
    %429 = vadd.xlane.f32.xlu0 %v428
    %v430 = vpop.xlane.xlu0 %429
    %v431 = vsel %vm352, %v346, 0.0
    %432 = vadd.xlane.f32.xlu0 %v431
    %v433 = vpop.xlane.xlu0 %432
    %v434 = vsel %vm352, %v347, 0.0
    %435 = vadd.xlane.f32.xlu0 %v434
    %v436 = vpop.xlane.xlu0 %435
    %v437 = vsel %vm352, %v348, 0.0
    %438 = vadd.xlane.f32.xlu0 %v437
    %v439 = vpop.xlane.xlu0 %438
    %v440 = vsel %vm352, %v349, 0.0
    %441 = vadd.xlane.f32.xlu0 %v440
    %v442 = vpop.xlane.xlu0 %441
    %v443 = vsel %vm352, %v350, 0.0
    %444 = vadd.xlane.f32.xlu0 %v443
    %v445 = vpop.xlane.xlu0 %444
    %v446 = vsel %vm352, %v351, 0.0
    %447 = vadd.xlane.f32.xlu0 %v446
    %v448 = vpop.xlane.xlu0 %447
    %v481 = vlaneseq
    %v482 = vand.u32 %v481, 127
    %v483 = vperm.slane %v355, %v482
    %v484 = vadd.s32 %v482, 4294967288
    %v485 = vperm.slane %v358, %v484
    %vm486 = vcmask 130112
    %v487 = vsel %vm486, %v485, %v483
    %v488 = vperm.slane %v361, %v482
    %v489 = vperm.slane %v364, %v484
    %v490 = vsel %vm486, %v489, %v488
    %v491 = vperm.slane %v367, %v482
    %v492 = vperm.slane %v370, %v484
    %v493 = vsel %vm486, %v492, %v491
    %v494 = vperm.slane %v373, %v482
    %v495 = vperm.slane %v376, %v484
    %v496 = vsel %vm486, %v495, %v494
    %v497 = vperm.slane %v379, %v482
    %v498 = vperm.slane %v382, %v484
    %v499 = vsel %vm486, %v498, %v497
    %v500 = vperm.slane %v385, %v482
    %v501 = vperm.slane %v388, %v484
    %v502 = vsel %vm486, %v501, %v500
    %v503 = vperm.slane %v391, %v482
    %v504 = vperm.slane %v394, %v484
    %v505 = vsel %vm486, %v504, %v503
    %v506 = vperm.slane %v397, %v482
    %v507 = vperm.slane %v400, %v484
    %v508 = vsel %vm486, %v507, %v506
    %v509 = vperm.slane %v403, %v482
    %v510 = vperm.slane %v406, %v484
    %v511 = vsel %vm486, %v510, %v509
    %v512 = vperm.slane %v409, %v482
    %v513 = vperm.slane %v412, %v484
    %v514 = vsel %vm486, %v513, %v512
    %v515 = vperm.slane %v415, %v482
    %v516 = vperm.slane %v418, %v484
    %v517 = vsel %vm486, %v516, %v515
    %v518 = vperm.slane %v421, %v482
    %v519 = vperm.slane %v424, %v484
    %v520 = vsel %vm486, %v519, %v518
    %v521 = vperm.slane %v427, %v482
    %v522 = vperm.slane %v430, %v484
    %v523 = vsel %vm486, %v522, %v521
    %v524 = vperm.slane %v433, %v482
    %v525 = vperm.slane %v436, %v484
    %v526 = vsel %vm486, %v525, %v524
    %v527 = vperm.slane %v439, %v482
    %v528 = vperm.slane %v442, %v484
    %v529 = vsel %vm486, %v528, %v527
    %v530 = vperm.slane %v445, %v482
    %v531 = vperm.slane %v448, %v484
    %v532 = vsel %vm486, %v531, %v530
    %vm533 = vcmask 1041409
    %v534 = vsel %vm533, %v490, %v487
    %vm535 = vcmask 1042434
    %v536 = vsel %vm535, %v493, %v534
    %vm537 = vcmask 1043459
    %v538 = vsel %vm537, %v496, %v536
    %vm539 = vcmask 1044484
    %v540 = vsel %vm539, %v499, %v538
    %vm541 = vcmask 1045509
    %v542 = vsel %vm541, %v502, %v540
    %vm543 = vcmask 1046534
    %v544 = vsel %vm543, %v505, %v542
    %vm545 = vcmask 1047559
    %v546 = vsel %vm545, %v508, %v544
    %v547 = vsel %vm533, %v514, %v511
    %v548 = vsel %vm535, %v517, %v547
    %v549 = vsel %vm537, %v520, %v548
    %v550 = vsel %vm539, %v523, %v549
    %v551 = vsel %vm541, %v526, %v550
    %v552 = vsel %vm543, %v529, %v551
    %v553 = vsel %vm545, %v532, %v552
    %v556 = vsel %vm352, %v546, -inf
    %557 = vmax.xlane.f32.xlu0 %v556
    %v558 = vpop.xlane.xlu0 %557
    %v559 = vsel %vm352, %v553, -inf
    %560 = vmax.xlane.f32.xlu0 %v559
    %v561 = vpop.xlane.xlu0 %560
    %v564 = vperm.slane %v558, 0
    %v565 = vperm.slane %v558, 1
    %v566 = vperm.slane %v558, 2
    %v567 = vperm.slane %v558, 3
    %v568 = vperm.slane %v558, 4
    %v569 = vperm.slane %v558, 5
    %v570 = vperm.slane %v558, 6
    %v571 = vperm.slane %v558, 7
    %v572 = vperm.slane %v561, 0
    %v573 = vperm.slane %v561, 1
    %v574 = vperm.slane %v561, 2
    %v575 = vperm.slane %v561, 3
    %v576 = vperm.slane %v561, 4
    %v577 = vperm.slane %v561, 5
    %v578 = vperm.slane %v561, 6
    %v579 = vperm.slane %v561, 7
    %v596 = vsub.f32 %v355, %v564
    %v597 = vsub.f32 %v358, %v564
    %v598 = vsub.f32 %v361, %v565
    %v599 = vsub.f32 %v364, %v565
    %v600 = vsub.f32 %v367, %v566
    %v601 = vsub.f32 %v370, %v566
    %v602 = vsub.f32 %v373, %v567
    %v603 = vsub.f32 %v376, %v567
    %v604 = vsub.f32 %v379, %v568
    %v605 = vsub.f32 %v382, %v568
    %v606 = vsub.f32 %v385, %v569
    %v607 = vsub.f32 %v388, %v569
    %v608 = vsub.f32 %v391, %v570
    %v609 = vsub.f32 %v394, %v570
    %v610 = vsub.f32 %v397, %v571
    %v611 = vsub.f32 %v400, %v571
    %v612 = vsub.f32 %v403, %v572
    %v613 = vsub.f32 %v406, %v572
    %v614 = vsub.f32 %v409, %v573
    %v615 = vsub.f32 %v412, %v573
    %v616 = vsub.f32 %v415, %v574
    %v617 = vsub.f32 %v418, %v574
    %v618 = vsub.f32 %v421, %v575
    %v619 = vsub.f32 %v424, %v575
    %v620 = vsub.f32 %v427, %v576
    %v621 = vsub.f32 %v430, %v576
    %v622 = vsub.f32 %v433, %v577
    %v623 = vsub.f32 %v436, %v577
    %v624 = vsub.f32 %v439, %v578
    %v625 = vsub.f32 %v442, %v578
    %v626 = vsub.f32 %v445, %v579
    %v627 = vsub.f32 %v448, %v579
    %v628 = vmul.f32 %v596, 1.442695
    %v629 = vpow.pop %v628
    %v630 = vmul.f32 %v597, 1.442695
    %v631 = vpow.pop %v630
    %v632 = vmul.f32 %v598, 1.442695
    %v633 = vpow.pop %v632
    %v634 = vmul.f32 %v599, 1.442695
    %v635 = vpow.pop %v634
    %v636 = vmul.f32 %v600, 1.442695
    %v637 = vpow.pop %v636
    %v638 = vmul.f32 %v601, 1.442695
    %v639 = vpow.pop %v638
    %v640 = vmul.f32 %v602, 1.442695
    %v641 = vpow.pop %v640
    %v642 = vmul.f32 %v603, 1.442695
    %v643 = vpow.pop %v642
    %v644 = vmul.f32 %v604, 1.442695
    %v645 = vpow.pop %v644
    %v646 = vmul.f32 %v605, 1.442695
    %v647 = vpow.pop %v646
    %v648 = vmul.f32 %v606, 1.442695
    %v649 = vpow.pop %v648
    %v650 = vmul.f32 %v607, 1.442695
    %v651 = vpow.pop %v650
    %v652 = vmul.f32 %v608, 1.442695
    %v653 = vpow.pop %v652
    %v654 = vmul.f32 %v609, 1.442695
    %v655 = vpow.pop %v654
    %v656 = vmul.f32 %v610, 1.442695
    %v657 = vpow.pop %v656
    %v658 = vmul.f32 %v611, 1.442695
    %v659 = vpow.pop %v658
    %v660 = vmul.f32 %v612, 1.442695
    %v661 = vpow.pop %v660
    %v662 = vmul.f32 %v613, 1.442695
    %v663 = vpow.pop %v662
    %v664 = vmul.f32 %v614, 1.442695
    %v665 = vpow.pop %v664
    %v666 = vmul.f32 %v615, 1.442695
    %v667 = vpow.pop %v666
    %v668 = vmul.f32 %v616, 1.442695
    %v669 = vpow.pop %v668
    %v670 = vmul.f32 %v617, 1.442695
    %v671 = vpow.pop %v670
    %v672 = vmul.f32 %v618, 1.442695
    %v673 = vpow.pop %v672
    %v674 = vmul.f32 %v619, 1.442695
    %v675 = vpow.pop %v674
    %v676 = vmul.f32 %v620, 1.442695
    %v677 = vpow.pop %v676
    %v678 = vmul.f32 %v621, 1.442695
    %v679 = vpow.pop %v678
    %v680 = vmul.f32 %v622, 1.442695
    %v681 = vpow.pop %v680
    %v682 = vmul.f32 %v623, 1.442695
    %v683 = vpow.pop %v682
    %v684 = vmul.f32 %v624, 1.442695
    %v685 = vpow.pop %v684
    %v686 = vmul.f32 %v625, 1.442695
    %v687 = vpow.pop %v686
    %v688 = vmul.f32 %v626, 1.442695
    %v689 = vpow.pop %v688
    %v690 = vmul.f32 %v627, 1.442695
    %v691 = vpow.pop %v690
    %724 = vset.pattern.permute.xlu0 0
    %725 = vperm.xlu0 %724, %v629
    %v726 = vpop.permute.xlu0 %725
    %727 = vset.pattern.permute.xlu0 0
    %728 = vperm.xlu0 %727, %v631
    %v729 = vpop.permute.xlu0 %728
    %730 = vset.pattern.permute.xlu0 0
    %731 = vperm.xlu0 %730, %v633
    %v732 = vpop.permute.xlu0 %731
    %733 = vset.pattern.permute.xlu0 0
    %734 = vperm.xlu0 %733, %v635
    %v735 = vpop.permute.xlu0 %734
    %736 = vset.pattern.permute.xlu0 0
    %737 = vperm.xlu0 %736, %v637
    %v738 = vpop.permute.xlu0 %737
    %739 = vset.pattern.permute.xlu0 0
    %740 = vperm.xlu0 %739, %v639
    %v741 = vpop.permute.xlu0 %740
    %742 = vset.pattern.permute.xlu0 0
    %743 = vperm.xlu0 %742, %v641
    %v744 = vpop.permute.xlu0 %743
    %745 = vset.pattern.permute.xlu0 0
    %746 = vperm.xlu0 %745, %v643
    %v747 = vpop.permute.xlu0 %746
    %748 = vset.pattern.permute.xlu0 0
    %749 = vperm.xlu0 %748, %v645
    %v750 = vpop.permute.xlu0 %749
    %751 = vset.pattern.permute.xlu0 0
    %752 = vperm.xlu0 %751, %v647
    %v753 = vpop.permute.xlu0 %752
    %754 = vset.pattern.permute.xlu0 0
    %755 = vperm.xlu0 %754, %v649
    %v756 = vpop.permute.xlu0 %755
    %757 = vset.pattern.permute.xlu0 0
    %758 = vperm.xlu0 %757, %v651
    %v759 = vpop.permute.xlu0 %758
    %760 = vset.pattern.permute.xlu0 0
    %761 = vperm.xlu0 %760, %v653
    %v762 = vpop.permute.xlu0 %761
    %763 = vset.pattern.permute.xlu0 0
    %764 = vperm.xlu0 %763, %v655
    %v765 = vpop.permute.xlu0 %764
    %766 = vset.pattern.permute.xlu0 0
    %767 = vperm.xlu0 %766, %v657
    %v768 = vpop.permute.xlu0 %767
    %769 = vset.pattern.permute.xlu0 0
    %770 = vperm.xlu0 %769, %v659
    %v771 = vpop.permute.xlu0 %770
    %772 = vset.pattern.permute.xlu0 0
    %773 = vperm.xlu0 %772, %v661
    %v774 = vpop.permute.xlu0 %773
    %775 = vset.pattern.permute.xlu0 0
    %776 = vperm.xlu0 %775, %v663
    %v777 = vpop.permute.xlu0 %776
    %778 = vset.pattern.permute.xlu0 0
    %779 = vperm.xlu0 %778, %v665
    %v780 = vpop.permute.xlu0 %779
    %781 = vset.pattern.permute.xlu0 0
    %782 = vperm.xlu0 %781, %v667
    %v783 = vpop.permute.xlu0 %782
    %784 = vset.pattern.permute.xlu0 0
    %785 = vperm.xlu0 %784, %v669
    %v786 = vpop.permute.xlu0 %785
    %787 = vset.pattern.permute.xlu0 0
    %788 = vperm.xlu0 %787, %v671
    %v789 = vpop.permute.xlu0 %788
    %790 = vset.pattern.permute.xlu0 0
    %791 = vperm.xlu0 %790, %v673
    %v792 = vpop.permute.xlu0 %791
    %793 = vset.pattern.permute.xlu0 0
    %794 = vperm.xlu0 %793, %v675
    %v795 = vpop.permute.xlu0 %794
    %796 = vset.pattern.permute.xlu0 0
    %797 = vperm.xlu0 %796, %v677
    %v798 = vpop.permute.xlu0 %797
    %799 = vset.pattern.permute.xlu0 0
    %800 = vperm.xlu0 %799, %v679
    %v801 = vpop.permute.xlu0 %800
    %802 = vset.pattern.permute.xlu0 0
    %803 = vperm.xlu0 %802, %v681
    %v804 = vpop.permute.xlu0 %803
    %805 = vset.pattern.permute.xlu0 0
    %806 = vperm.xlu0 %805, %v683
    %v807 = vpop.permute.xlu0 %806
    %808 = vset.pattern.permute.xlu0 0
    %809 = vperm.xlu0 %808, %v685
    %v810 = vpop.permute.xlu0 %809
    %811 = vset.pattern.permute.xlu0 0
    %812 = vperm.xlu0 %811, %v687
    %v813 = vpop.permute.xlu0 %812
    %814 = vset.pattern.permute.xlu0 0
    %815 = vperm.xlu0 %814, %v689
    %v816 = vpop.permute.xlu0 %815
    %817 = vset.pattern.permute.xlu0 0
    %818 = vperm.xlu0 %817, %v691
    %v819 = vpop.permute.xlu0 %818
    %v820 = vperm.slane %v726, %v482
    %v821 = vperm.slane %v729, %v484
    %v822 = vsel %vm486, %v821, %v820
    %v823 = vperm.slane %v732, %v482
    %v824 = vperm.slane %v735, %v484
    %v825 = vsel %vm486, %v824, %v823
    %v826 = vperm.slane %v738, %v482
    %v827 = vperm.slane %v741, %v484
    %v828 = vsel %vm486, %v827, %v826
    %v829 = vperm.slane %v744, %v482
    %v830 = vperm.slane %v747, %v484
    %v831 = vsel %vm486, %v830, %v829
    %v832 = vperm.slane %v750, %v482
    %v833 = vperm.slane %v753, %v484
    %v834 = vsel %vm486, %v833, %v832
    %v835 = vperm.slane %v756, %v482
    %v836 = vperm.slane %v759, %v484
    %v837 = vsel %vm486, %v836, %v835
    %v838 = vperm.slane %v762, %v482
    %v839 = vperm.slane %v765, %v484
    %v840 = vsel %vm486, %v839, %v838
    %v841 = vperm.slane %v768, %v482
    %v842 = vperm.slane %v771, %v484
    %v843 = vsel %vm486, %v842, %v841
    %v844 = vperm.slane %v774, %v482
    %v845 = vperm.slane %v777, %v484
    %v846 = vsel %vm486, %v845, %v844
    %v847 = vperm.slane %v780, %v482
    %v848 = vperm.slane %v783, %v484
    %v849 = vsel %vm486, %v848, %v847
    %v850 = vperm.slane %v786, %v482
    %v851 = vperm.slane %v789, %v484
    %v852 = vsel %vm486, %v851, %v850
    %v853 = vperm.slane %v792, %v482
    %v854 = vperm.slane %v795, %v484
    %v855 = vsel %vm486, %v854, %v853
    %v856 = vperm.slane %v798, %v482
    %v857 = vperm.slane %v801, %v484
    %v858 = vsel %vm486, %v857, %v856
    %v859 = vperm.slane %v804, %v482
    %v860 = vperm.slane %v807, %v484
    %v861 = vsel %vm486, %v860, %v859
    %v862 = vperm.slane %v810, %v482
    %v863 = vperm.slane %v813, %v484
    %v864 = vsel %vm486, %v863, %v862
    %v865 = vperm.slane %v816, %v482
    %v866 = vperm.slane %v819, %v484
    %v867 = vsel %vm486, %v866, %v865
    %v868 = vsel %vm533, %v825, %v822
    %v869 = vsel %vm535, %v828, %v868
    %v870 = vsel %vm537, %v831, %v869
    %v871 = vsel %vm539, %v834, %v870
    %v872 = vsel %vm541, %v837, %v871
    %v873 = vsel %vm543, %v840, %v872
    %v874 = vsel %vm545, %v843, %v873
    %v875 = vsel %vm533, %v849, %v846
    %v876 = vsel %vm535, %v852, %v875
    %v877 = vsel %vm537, %v855, %v876
    %v878 = vsel %vm539, %v858, %v877
    %v879 = vsel %vm541, %v861, %v878
    %v880 = vsel %vm543, %v864, %v879
    %v881 = vsel %vm545, %v867, %v880
    %v884 = vsel %vm352, %v874, 0.0
    %885 = vadd.xlane.f32.xlu0 %v884
    %v886 = vpop.xlane.xlu0 %885
    %v887 = vsel %vm352, %v881, 0.0
    %888 = vadd.xlane.f32.xlu0 %v887
    %v889 = vpop.xlane.xlu0 %888
    %v890 = vrcp.pop %v886
    %v891 = vmul.f32 %v886, %v890
    %v892 = vsub.f32 1.0, %v891
    %v893 = vmul.f32 %v890, %v892
    %v894 = vadd.f32 %v890, %v893
    %vm895 = vweird.f32 %v886
    %vm896 = vweird.f32 %v890
    %vm897 = vmor %vm895, %vm896
    %v898 = vsel %vm897, %v890, %v894
    %v899 = vand.u32 2147483647, %v886
    %vm900 = vcmp.eq.f32.partialorder %v899, 8.507059e+37
    %v901 = vand.u32 %v886, 2147483648
    %v902 = vor.u32 1.1754944e-38, %v901
    %v903 = vsel %vm900, %v902, %v898
    %v904 = vrcp.pop %v889
    %v905 = vmul.f32 %v889, %v904
    %v906 = vsub.f32 1.0, %v905
    %v907 = vmul.f32 %v904, %v906
    %v908 = vadd.f32 %v904, %v907
    %vm909 = vweird.f32 %v889
    %vm910 = vweird.f32 %v904
    %vm911 = vmor %vm909, %vm910
    %v912 = vsel %vm911, %v904, %v908
    %v913 = vand.u32 2147483647, %v889
    %vm914 = vcmp.eq.f32.partialorder %v913, 8.507059e+37
    %v915 = vand.u32 %v889, 2147483648
    %v916 = vor.u32 1.1754944e-38, %v915
    %v917 = vsel %vm914, %v916, %v912
    %v920 = vperm.slane %v903, 0
    %v921 = vperm.slane %v903, 1
    %v922 = vperm.slane %v903, 2
    %v923 = vperm.slane %v903, 3
    %v924 = vperm.slane %v903, 4
    %v925 = vperm.slane %v903, 5
    %v926 = vperm.slane %v903, 6
    %v927 = vperm.slane %v903, 7
    %v928 = vperm.slane %v917, 0
    %v929 = vperm.slane %v917, 1
    %v930 = vperm.slane %v917, 2
    %v931 = vperm.slane %v917, 3
    %v932 = vperm.slane %v917, 4
    %v933 = vperm.slane %v917, 5
    %v934 = vperm.slane %v917, 6
    %v935 = vperm.slane %v917, 7
    %v952 = vmul.f32 %v629, %v920
    %v953 = vmul.f32 %v631, %v920
    %v954 = vmul.f32 %v633, %v921
    %v955 = vmul.f32 %v635, %v921
    %v956 = vmul.f32 %v637, %v922
    %v957 = vmul.f32 %v639, %v922
    %v958 = vmul.f32 %v641, %v923
    %v959 = vmul.f32 %v643, %v923
    %v960 = vmul.f32 %v645, %v924
    %v961 = vmul.f32 %v647, %v924
    %v962 = vmul.f32 %v649, %v925
    %v963 = vmul.f32 %v651, %v925
    %v964 = vmul.f32 %v653, %v926
    %v965 = vmul.f32 %v655, %v926
    %v966 = vmul.f32 %v657, %v927
    %v967 = vmul.f32 %v659, %v927
    %v968 = vmul.f32 %v661, %v928
    %v969 = vmul.f32 %v663, %v928
    %v970 = vmul.f32 %v665, %v929
    %v971 = vmul.f32 %v667, %v929
    %v972 = vmul.f32 %v669, %v930
    %v973 = vmul.f32 %v671, %v930
    %v974 = vmul.f32 %v673, %v931
    %v975 = vmul.f32 %v675, %v931
    %v976 = vmul.f32 %v677, %v932
    %v977 = vmul.f32 %v679, %v932
    %v978 = vmul.f32 %v681, %v933
    %v979 = vmul.f32 %v683, %v933
    %v980 = vmul.f32 %v685, %v934
    %v981 = vmul.f32 %v687, %v934
    %v982 = vmul.f32 %v689, %v935
    %v983 = vmul.f32 %v691, %v935
    %985 = vset.pattern.permute.xlu0 0
    %986 = vperm.xlu0 %985, %v952
    %v987 = vpop.permute.xlu0 %986
    %990 = vset.pattern.permute.xlu0 0
    %991 = vperm.xlu0 %990, %v953
    %v992 = vpop.permute.xlu0 %991
    %995 = vset.pattern.permute.xlu0 0
    %996 = vperm.xlu0 %995, %v954
    %v997 = vpop.permute.xlu0 %996
    %1000 = vset.pattern.permute.xlu0 0
    %1001 = vperm.xlu0 %1000, %v955
    %v1002 = vpop.permute.xlu0 %1001
    %1005 = vset.pattern.permute.xlu0 0
    %1006 = vperm.xlu0 %1005, %v956
    %v1007 = vpop.permute.xlu0 %1006
    %1010 = vset.pattern.permute.xlu0 0
    %1011 = vperm.xlu0 %1010, %v957
    %v1012 = vpop.permute.xlu0 %1011
    %1015 = vset.pattern.permute.xlu0 0
    %1016 = vperm.xlu0 %1015, %v958
    %v1017 = vpop.permute.xlu0 %1016
    %1020 = vset.pattern.permute.xlu0 0
    %1021 = vperm.xlu0 %1020, %v959
    %v1022 = vpop.permute.xlu0 %1021
    %1025 = vset.pattern.permute.xlu0 0
    %1026 = vperm.xlu0 %1025, %v960
    %v1027 = vpop.permute.xlu0 %1026
    %1030 = vset.pattern.permute.xlu0 0
    %1031 = vperm.xlu0 %1030, %v961
    %v1032 = vpop.permute.xlu0 %1031
    %1035 = vset.pattern.permute.xlu0 0
    %1036 = vperm.xlu0 %1035, %v962
    %v1037 = vpop.permute.xlu0 %1036
    %1040 = vset.pattern.permute.xlu0 0
    %1041 = vperm.xlu0 %1040, %v963
    %v1042 = vpop.permute.xlu0 %1041
    %1045 = vset.pattern.permute.xlu0 0
    %1046 = vperm.xlu0 %1045, %v964
    %v1047 = vpop.permute.xlu0 %1046
    %1050 = vset.pattern.permute.xlu0 0
    %1051 = vperm.xlu0 %1050, %v965
    %v1052 = vpop.permute.xlu0 %1051
    %1055 = vset.pattern.permute.xlu0 0
    %1056 = vperm.xlu0 %1055, %v966
    %v1057 = vpop.permute.xlu0 %1056
    %1060 = vset.pattern.permute.xlu0 0
    %1061 = vperm.xlu0 %1060, %v967
    %v1062 = vpop.permute.xlu0 %1061
    %1065 = vset.pattern.permute.xlu0 0
    %1066 = vperm.xlu0 %1065, %v968
    %v1067 = vpop.permute.xlu0 %1066
    %1070 = vset.pattern.permute.xlu0 0
    %1071 = vperm.xlu0 %1070, %v969
    %v1072 = vpop.permute.xlu0 %1071
    %1075 = vset.pattern.permute.xlu0 0
    %1076 = vperm.xlu0 %1075, %v970
    %v1077 = vpop.permute.xlu0 %1076
    %1080 = vset.pattern.permute.xlu0 0
    %1081 = vperm.xlu0 %1080, %v971
    %v1082 = vpop.permute.xlu0 %1081
    %1085 = vset.pattern.permute.xlu0 0
    %1086 = vperm.xlu0 %1085, %v972
    %v1087 = vpop.permute.xlu0 %1086
    %1090 = vset.pattern.permute.xlu0 0
    %1091 = vperm.xlu0 %1090, %v973
    %v1092 = vpop.permute.xlu0 %1091
    %1095 = vset.pattern.permute.xlu0 0
    %1096 = vperm.xlu0 %1095, %v974
    %v1097 = vpop.permute.xlu0 %1096
    %1100 = vset.pattern.permute.xlu0 0
    %1101 = vperm.xlu0 %1100, %v975
    %v1102 = vpop.permute.xlu0 %1101
    %1105 = vset.pattern.permute.xlu0 0
    %1106 = vperm.xlu0 %1105, %v976
    %v1107 = vpop.permute.xlu0 %1106
    %1110 = vset.pattern.permute.xlu0 0
    %1111 = vperm.xlu0 %1110, %v977
    %v1112 = vpop.permute.xlu0 %1111
    %1115 = vset.pattern.permute.xlu0 0
    %1116 = vperm.xlu0 %1115, %v978
    %v1117 = vpop.permute.xlu0 %1116
    %1120 = vset.pattern.permute.xlu0 0
    %1121 = vperm.xlu0 %1120, %v979
    %v1122 = vpop.permute.xlu0 %1121
    %1125 = vset.pattern.permute.xlu0 0
    %1126 = vperm.xlu0 %1125, %v980
    %v1127 = vpop.permute.xlu0 %1126
    %1130 = vset.pattern.permute.xlu0 0
    %1131 = vperm.xlu0 %1130, %v981
    %v1132 = vpop.permute.xlu0 %1131
    %1135 = vset.pattern.permute.xlu0 0
    %1136 = vperm.xlu0 %1135, %v982
    %v1137 = vpop.permute.xlu0 %1136
    %1140 = vset.pattern.permute.xlu0 0
    %1141 = vperm.xlu0 %1140, %v983
    %v1142 = vpop.permute.xlu0 %1141
    %v1144 = vmul.f32 %v34, %v987
    %v1145 = vmul.f32 %v35, %v992
    %v1146 = vmul.f32 %v36, %v997
    %v1147 = vmul.f32 %v37, %v1002
    %v1148 = vmul.f32 %v38, %v1007
    %v1149 = vmul.f32 %v39, %v1012
    %v1150 = vmul.f32 %v40, %v1017
    %v1151 = vmul.f32 %v41, %v1022
    %v1152 = vmul.f32 %v42, %v1027
    %v1153 = vmul.f32 %v43, %v1032
    %v1154 = vmul.f32 %v44, %v1037
    %v1155 = vmul.f32 %v45, %v1042
    %v1156 = vmul.f32 %v46, %v1047
    %v1157 = vmul.f32 %v47, %v1052
    %v1158 = vmul.f32 %v48, %v1057
    %v1159 = vmul.f32 %v49, %v1062
    %v1160 = vmul.f32 %v50, %v1067
    %v1161 = vmul.f32 %v51, %v1072
    %v1162 = vmul.f32 %v52, %v1077
    %v1163 = vmul.f32 %v53, %v1082
    %v1164 = vmul.f32 %v54, %v1087
    %v1165 = vmul.f32 %v55, %v1092
    %v1166 = vmul.f32 %v56, %v1097
    %v1167 = vmul.f32 %v57, %v1102
    %v1168 = vmul.f32 %v58, %v1107
    %v1169 = vmul.f32 %v59, %v1112
    %v1170 = vmul.f32 %v60, %v1117
    %v1171 = vmul.f32 %v61, %v1122
    %v1172 = vmul.f32 %v62, %v1127
    %v1173 = vmul.f32 %v63, %v1132
    %v1174 = vmul.f32 %v64, %v1137
    %v1175 = vmul.f32 %v65, %v1142
    %v1176 = vsel %vm74, %v1144, 0.0
    %v1177 = vsel %vm74, %v1145, 0.0
    %v1178 = vadd.f32 %v1176, %v1177
    %v1179 = vrot.slane %v1178, 4
    %v1180 = vadd.f32 %v1178, %v1179
    %v1181 = vrot.slane %v1180, 2
    %v1182 = vadd.f32 %v1180, %v1181
    %v1183 = vrot.slane %v1182, 1
    %v1184 = vadd.f32 %v1182, %v1183
    %v1185 = vsel %vm74, %v1146, 0.0
    %v1186 = vsel %vm74, %v1147, 0.0
    %v1187 = vadd.f32 %v1185, %v1186
    %v1188 = vrot.slane %v1187, 4
    %v1189 = vadd.f32 %v1187, %v1188
    %v1190 = vrot.slane %v1189, 2
    %v1191 = vadd.f32 %v1189, %v1190
    %v1192 = vrot.slane %v1191, 1
    %v1193 = vadd.f32 %v1191, %v1192
    %v1194 = vsel %vm74, %v1148, 0.0
    %v1195 = vsel %vm74, %v1149, 0.0
    %v1196 = vadd.f32 %v1194, %v1195
    %v1197 = vrot.slane %v1196, 4
    %v1198 = vadd.f32 %v1196, %v1197
    %v1199 = vrot.slane %v1198, 2
    %v1200 = vadd.f32 %v1198, %v1199
    %v1201 = vrot.slane %v1200, 1
    %v1202 = vadd.f32 %v1200, %v1201
    %v1203 = vsel %vm74, %v1150, 0.0
    %v1204 = vsel %vm74, %v1151, 0.0
    %v1205 = vadd.f32 %v1203, %v1204
    %v1206 = vrot.slane %v1205, 4
    %v1207 = vadd.f32 %v1205, %v1206
    %v1208 = vrot.slane %v1207, 2
    %v1209 = vadd.f32 %v1207, %v1208
    %v1210 = vrot.slane %v1209, 1
    %v1211 = vadd.f32 %v1209, %v1210
    %v1212 = vsel %vm74, %v1152, 0.0
    %v1213 = vsel %vm74, %v1153, 0.0
    %v1214 = vadd.f32 %v1212, %v1213
    %v1215 = vrot.slane %v1214, 4
    %v1216 = vadd.f32 %v1214, %v1215
    %v1217 = vrot.slane %v1216, 2
    %v1218 = vadd.f32 %v1216, %v1217
    %v1219 = vrot.slane %v1218, 1
    %v1220 = vadd.f32 %v1218, %v1219
    %v1221 = vsel %vm74, %v1154, 0.0
    %v1222 = vsel %vm74, %v1155, 0.0
    %v1223 = vadd.f32 %v1221, %v1222
    %v1224 = vrot.slane %v1223, 4
    %v1225 = vadd.f32 %v1223, %v1224
    %v1226 = vrot.slane %v1225, 2
    %v1227 = vadd.f32 %v1225, %v1226
    %v1228 = vrot.slane %v1227, 1
    %v1229 = vadd.f32 %v1227, %v1228
    %v1230 = vsel %vm74, %v1156, 0.0
    %v1231 = vsel %vm74, %v1157, 0.0
    %v1232 = vadd.f32 %v1230, %v1231
    %v1233 = vrot.slane %v1232, 4
    %v1234 = vadd.f32 %v1232, %v1233
    %v1235 = vrot.slane %v1234, 2
    %v1236 = vadd.f32 %v1234, %v1235
    %v1237 = vrot.slane %v1236, 1
    %v1238 = vadd.f32 %v1236, %v1237
    %v1239 = vsel %vm74, %v1158, 0.0
    %v1240 = vsel %vm74, %v1159, 0.0
    %v1241 = vadd.f32 %v1239, %v1240
    %v1242 = vrot.slane %v1241, 4
    %v1243 = vadd.f32 %v1241, %v1242
    %v1244 = vrot.slane %v1243, 2
    %v1245 = vadd.f32 %v1243, %v1244
    %v1246 = vrot.slane %v1245, 1
    %v1247 = vadd.f32 %v1245, %v1246
    %v1248 = vsel %vm74, %v1160, 0.0
    %v1249 = vsel %vm74, %v1161, 0.0
    %v1250 = vadd.f32 %v1248, %v1249
    %v1251 = vrot.slane %v1250, 4
    %v1252 = vadd.f32 %v1250, %v1251
    %v1253 = vrot.slane %v1252, 2
    %v1254 = vadd.f32 %v1252, %v1253
    %v1255 = vrot.slane %v1254, 1
    %v1256 = vadd.f32 %v1254, %v1255
    %v1257 = vsel %vm74, %v1162, 0.0
    %v1258 = vsel %vm74, %v1163, 0.0
    %v1259 = vadd.f32 %v1257, %v1258
    %v1260 = vrot.slane %v1259, 4
    %v1261 = vadd.f32 %v1259, %v1260
    %v1262 = vrot.slane %v1261, 2
    %v1263 = vadd.f32 %v1261, %v1262
    %v1264 = vrot.slane %v1263, 1
    %v1265 = vadd.f32 %v1263, %v1264
    %v1266 = vsel %vm74, %v1164, 0.0
    %v1267 = vsel %vm74, %v1165, 0.0
    %v1268 = vadd.f32 %v1266, %v1267
    %v1269 = vrot.slane %v1268, 4
    %v1270 = vadd.f32 %v1268, %v1269
    %v1271 = vrot.slane %v1270, 2
    %v1272 = vadd.f32 %v1270, %v1271
    %v1273 = vrot.slane %v1272, 1
    %v1274 = vadd.f32 %v1272, %v1273
    %v1275 = vsel %vm74, %v1166, 0.0
    %v1276 = vsel %vm74, %v1167, 0.0
    %v1277 = vadd.f32 %v1275, %v1276
    %v1278 = vrot.slane %v1277, 4
    %v1279 = vadd.f32 %v1277, %v1278
    %v1280 = vrot.slane %v1279, 2
    %v1281 = vadd.f32 %v1279, %v1280
    %v1282 = vrot.slane %v1281, 1
    %v1283 = vadd.f32 %v1281, %v1282
    %v1284 = vsel %vm74, %v1168, 0.0
    %v1285 = vsel %vm74, %v1169, 0.0
    %v1286 = vadd.f32 %v1284, %v1285
    %v1287 = vrot.slane %v1286, 4
    %v1288 = vadd.f32 %v1286, %v1287
    %v1289 = vrot.slane %v1288, 2
    %v1290 = vadd.f32 %v1288, %v1289
    %v1291 = vrot.slane %v1290, 1
    %v1292 = vadd.f32 %v1290, %v1291
    %v1293 = vsel %vm74, %v1170, 0.0
    %v1294 = vsel %vm74, %v1171, 0.0
    %v1295 = vadd.f32 %v1293, %v1294
    %v1296 = vrot.slane %v1295, 4
    %v1297 = vadd.f32 %v1295, %v1296
    %v1298 = vrot.slane %v1297, 2
    %v1299 = vadd.f32 %v1297, %v1298
    %v1300 = vrot.slane %v1299, 1
    %v1301 = vadd.f32 %v1299, %v1300
    %v1302 = vsel %vm74, %v1172, 0.0
    %v1303 = vsel %vm74, %v1173, 0.0
    %v1304 = vadd.f32 %v1302, %v1303
    %v1305 = vrot.slane %v1304, 4
    %v1306 = vadd.f32 %v1304, %v1305
    %v1307 = vrot.slane %v1306, 2
    %v1308 = vadd.f32 %v1306, %v1307
    %v1309 = vrot.slane %v1308, 1
    %v1310 = vadd.f32 %v1308, %v1309
    %v1311 = vsel %vm74, %v1174, 0.0
    %v1312 = vsel %vm74, %v1175, 0.0
    %v1313 = vadd.f32 %v1311, %v1312
    %v1314 = vrot.slane %v1313, 4
    %v1315 = vadd.f32 %v1313, %v1314
    %v1316 = vrot.slane %v1315, 2
    %v1317 = vadd.f32 %v1315, %v1316
    %v1318 = vrot.slane %v1317, 1
    %v1319 = vadd.f32 %v1317, %v1318
    %v1336 = vsel %vm533, %v1193, %v1184
    %v1337 = vsel %vm535, %v1202, %v1336
    %v1338 = vsel %vm537, %v1211, %v1337
    %v1339 = vsel %vm539, %v1220, %v1338
    %v1340 = vsel %vm541, %v1229, %v1339
    %v1341 = vsel %vm543, %v1238, %v1340
    %v1342 = vsel %vm545, %v1247, %v1341
    %v1343 = vsel %vm533, %v1265, %v1256
    %v1344 = vsel %vm535, %v1274, %v1343
    %v1345 = vsel %vm537, %v1283, %v1344
    %v1346 = vsel %vm539, %v1292, %v1345
    %v1347 = vsel %vm541, %v1301, %v1346
    %v1348 = vsel %vm543, %v1310, %v1347
    %v1349 = vsel %vm545, %v1319, %v1348
    %1352 = vst.msk [vmem:[#allocation5] sm:$0xff] %vm74, %v1342
    %1353 = vst.msk [vmem:[#allocation5 + $0x8] sm:$0xff] %vm74, %v1349
    // Predicated region
    $region22: #{tpu_custom_call.1} parent=1 // pred_check
      _
    $region23: #{tpu_custom_call.1} parent=1 // pred_check_branch
      %1355 = sbr.rel (0) target = $region25
    $region24: #{tpu_custom_call.1} parent=1 // pred_region
      %1357 = vsyncadd [#allocation4], 0
      %s1358 = sshll.u32 [#allocation5], 4
      %s1359 = int_to_ptr.vmem [resolvable:$true] %s1358
      %s1360 = sshll.u32 %s4, 4
      %s1361 = int_to_ptr.hbm [resolvable:$true] %s1360
      %1366 = dma.vmem_to_hbm [thread:$0]  %s1359, 256, %s1361, [#allocation4], 128, 128, 8
    $region25: #{tpu_custom_call.1} parent=1 // pred_fallthru
      _
    // Predicated region
    $region26: #{tpu_custom_call.1} parent=1 // pred_check
      _
    $region27: #{tpu_custom_call.1} parent=1 // pred_check_branch
      %1368 = sbr.rel (0) target = $region29
    $region28: #{tpu_custom_call.1} parent=1 // pred_region
      %1370 = dma.done [#allocation4], 256
    $region29: #{tpu_custom_call.1} parent=1 // pred_fallthru
      _
    %1371 = vsyncpa [#allocation3], 1
    %1372 = vsyncpa [#allocation4], 1

</llo_original>
